<compile_context>
chip_gen: v7x
topology: tpu7x:2x2x1
jax: 0.10.0
libtpu: 0.0.40
codegen_flags: <defaults>
</compile_context>

<pallas_src>
import jax
import jax.numpy as jnp
from jax.experimental import pallas as pl
from jax.experimental.pallas import tpu as pltpu


# ----------------------------------------------------------------------------
# Kernel
# ----------------------------------------------------------------------------
def _hamming_attn_kernel(q_ref, k_ref, v_ref, out_ref, score_ref, km_ref):
    # q_ref: (HB, TQ, D) bf16   k_ref/v_ref: (HB, Sk, D) bf16
    # out_ref: (HB, TQ, D)      score_ref: (HB, TQ, Sk)
    # km_ref:  (HB, Sk, D) bf16 VMEM scratch, persistent across grid steps.
    d = k_ref.shape[-1]
    inv_2d = 0.5 / d  # applied in f32 post-matmul; exact for any D

    # The K block only changes with the head-block axis (grid axis 0), so the
    # (2k-1) transform is computed once per head block and reused for every
    # q-tile.  Correct because the q-tile axis is "arbitrary" (sequential).
    @pl.when(pl.program_id(1) == 0)
    def _():
        km_ref[...] = (2.0 * k_ref[...] - 1.0).astype(jnp.bfloat16)

    # +-1 values are exact in bf16, so the raw QK^T logits are exact with an
    # f32 MXU accumulator.
    qm = (2.0 * q_ref[...] - 1.0).astype(jnp.bfloat16)
    s = jnp.einsum("bqd,bkd->bqk", qm, km_ref[...],
                   preferred_element_type=jnp.float32)

    # softmax(0.5 + s/(2d)) over keys: the +0.5 shift cancels; the 1/(2d)
    # scale is applied in f32 inside the exp argument (hides under EUP/MXU).
    s_max = jnp.max(s, axis=-1, keepdims=True)
    e = jnp.exp((s - s_max) * inv_2d)
    p = e * pl.reciprocal(jnp.sum(e, axis=-1, keepdims=True), approx=True)

    # PV matmul on the MXU in bf16 with f32 accumulation.
    out = jnp.einsum("bqk,bkd->bqd", p.astype(jnp.bfloat16), v_ref[...],
                     preferred_element_type=jnp.float32)

    out_ref[...] = out.astype(out_ref.dtype)
    score_ref[...] = p.astype(score_ref.dtype)


# ----------------------------------------------------------------------------
# VMEM-aware sizing helpers
# ----------------------------------------------------------------------------
def _vmem_budget_bytes():
    """Per-generation scoped-VMEM budget (~38 MiB on v7x, ~76 MiB on v5e/v6e)."""
    cap = 128 << 20
    try:
        cap = int(getattr(pltpu.get_tpu_info(), "vmem_capacity_bytes", cap))
    except Exception:
        pass
    return max(16 << 20, min(int(0.6 * cap), cap - (24 << 20)))


def _vmem_step_bytes(hb, tq, sk, d):
    """Estimated VMEM footprint for one grid step at head-block size `hb`."""
    bf16, f32 = 2, 4
    # Double-buffered pipeline slabs (bf16 inputs, bf16 score, out in io dtype
    # -- bounded here by f32 for the out slab).
    pipe = 2 * hb * ((tq * d + 2 * sk * d + tq * sk) * bf16 + tq * d * f32)
    # Persistent km scratch (single-buffered).
    scratch = hb * sk * d * bf16
    # In-body temporaries: qm bf16, ~3x (s, s-s_max/e, p) f32, p bf16, out f32.
    temps = hb * (tq * d * bf16 + 3 * tq * sk * f32 + tq * sk * bf16 + tq * d * f32)
    return pipe + scratch + temps


def _pick_tq(sq, sk, d, budget):
    """Query-tile size: MXU-friendly when Sq is large, shrunk to fit VMEM."""
    cands = [t for t in (256, 128, 64, 32, 16, 8) if t < sq and sq % t == 0]
    tq = sq if (sq <= 256 or not cands) else cands[0]
    while _vmem_step_bytes(1, tq, sk, d) > budget:
        smaller = [t for t in cands if t < tq]
        if not smaller:
            break  # TODO(synk): pad+mask Sq instead of a full-Sq tile here.
        tq = smaller[0]
    return tq


def _pick_hb(bh, tq, sk, d, budget):
    """Heads per grid step: amortize per-step overhead within the VMEM budget,
    biased toward >= 2 head blocks so megacore can shard the head axis."""
    best = 1
    for hb in range(1, min(bh, 64) + 1):
        if bh % hb != 0:
            continue
        if bh >= 2 and bh // hb < 2:
            continue
        if _vmem_step_bytes(hb, tq, sk, d) <= budget:
            best = hb
    return best


# ----------------------------------------------------------------------------
# Wrapper
# ----------------------------------------------------------------------------
def hamming_distance_attention(q, k, v, *, score_dtype=jnp.bfloat16):
    """q, k, v: (B, H, S, D) arrays. Returns (out, score) like the module.

    out is returned in q.dtype; score defaults to bf16 (halves the dominant
    HBM score writeback); pass score_dtype=q.dtype for full-precision scores.
    """
    B, H, Sq, D = q.shape
    Sk = k.shape[2]
    BH = B * H
    out_dtype = q.dtype

    # bf16 inputs: exact for 0/1 spikes, halves DMA bytes and K/V VMEM slabs.
    qf = q.reshape(BH, Sq, D).astype(jnp.bfloat16)
    kf = k.reshape(BH, Sk, D).astype(jnp.bfloat16)
    vf = v.reshape(BH, Sk, D).astype(jnp.bfloat16)

    budget = _vmem_budget_bytes()
    TQ = _pick_tq(Sq, Sk, D, budget)
    n_q_tiles = Sq // TQ
    HB = _pick_hb(BH, TQ, Sk, D, budget)
    n_head_blocks = BH // HB

    out_f, score_f = pl.pallas_call(
        _hamming_attn_kernel,
        out_shape=(
            jax.ShapeDtypeStruct((BH, Sq, D), out_dtype),
            jax.ShapeDtypeStruct((BH, Sq, Sk), score_dtype),
        ),
        grid_spec=pltpu.PrefetchScalarGridSpec(
            num_scalar_prefetch=0,
            grid=(n_head_blocks, n_q_tiles),
            in_specs=[
                pl.BlockSpec((HB, TQ, D), lambda i, j: (i, j, 0)),
                pl.BlockSpec((HB, Sk, D), lambda i, j: (i, 0, 0)),
                pl.BlockSpec((HB, Sk, D), lambda i, j: (i, 0, 0)),
            ],
            out_specs=[
                pl.BlockSpec((HB, TQ, D), lambda i, j: (i, j, 0)),
                pl.BlockSpec((HB, TQ, Sk), lambda i, j: (i, j, 0)),
            ],
            scratch_shapes=[pltpu.VMEM((HB, Sk, D), jnp.bfloat16)],
        ),
        compiler_params=pltpu.CompilerParams(
            # Head-block axis parallel (unique K/V per core); q-tile axis must
            # stay sequential for the hoisted K-transform scratch.
            dimension_semantics=("parallel", "arbitrary"),
            vmem_limit_bytes=int(budget),
        ),
    )(qf, kf, vf)

    return out_f.reshape(B, H, Sq, D), score_f.reshape(B, H, Sq, Sk)


# ----------------------------------------------------------------------------
# Pure-JAX reference (matches the PyTorch module, f32)
# ----------------------------------------------------------------------------
def _reference(q, k, v):
    d = k.shape[-1]
    score = 0.5 * (1.0 + jnp.einsum("bhqd,bhkd->bhqk", 2.0 * q - 1.0, 2.0 * k - 1.0) / d)
    score = jax.nn.softmax(score, axis=-1)
    out = jnp.einsum("bhqk,bhkd->bhqd", score, v)
    return out, score


if __name__ == "__main__":
    key = jax.random.PRNGKey(0)
    kq, kk, kv = jax.random.split(key, 3)

    B, H, S, D = 2, 4, 16, 32
    # Spiking-transformer style binary (0/1) activations for q/k, real v.
    q = jax.random.bernoulli(kq, 0.5, (B, H, S, D)).astype(jnp.float32)
    k = jax.random.bernoulli(kk, 0.5, (B, H, S, D)).astype(jnp.float32)
    v = jax.random.normal(kv, (B, H, S, D), dtype=jnp.float32)

    out, score = hamming_distance_attention(q, k, v)
    out = jax.block_until_ready(out)
    score = jax.block_until_ready(score)

    out_ref, score_ref = _reference(q, k, v)
    # Tolerances absorb bf16 score storage, bf16 PV matmul and the EUP approx
    # reciprocal (the QK^T logits themselves are exact for +-1 bf16 inputs).
    assert jnp.allclose(score.astype(jnp.float32), score_ref, atol=5e-3, rtol=5e-3)
    assert jnp.allclose(out, out_ref, atol=3e-2, rtol=3e-2)

    print("KERNEL_OK")
</pallas_src>

<mosaic_0001>
module attributes {stable_mosaic.version = 11 : i64} {
  func.func @_hamming_attn_kernel(%arg0: i32, %arg1: i32, %arg2: memref<4x16x32xbf16, #tpu.memory_space<vmem>>, %arg3: memref<4x16x32xbf16, #tpu.memory_space<vmem>>, %arg4: memref<4x16x32xbf16, #tpu.memory_space<vmem>>, %arg5: memref<4x16x32xf32, #tpu.memory_space<vmem>>, %arg6: memref<4x16x16xbf16, #tpu.memory_space<vmem>>, %arg7: memref<4x16x32xbf16, #tpu.memory_space<vmem>>) attributes {dimension_semantics = [#tpu.dimension_semantics<parallel>, #tpu.dimension_semantics<arbitrary>], iteration_bounds = array<i64: 2, 1>, scalar_prefetch = 0 : i64, scratch_operands = 1 : i64, tpu.core_type = #tpu.core_type<tc>, window_params = [{transform_indices = @transform_0, window_bounds = array<i64: 4, 16, 32>}, {transform_indices = @transform_1, window_bounds = array<i64: 4, 16, 32>}, {transform_indices = @transform_2, window_bounds = array<i64: 4, 16, 32>}, {transform_indices = @transform_3, window_bounds = array<i64: 4, 16, 32>}, {transform_indices = @transform_4, window_bounds = array<i64: 4, 16, 16>}]} {
    %c0_i32 = arith.constant 0 : i32
    %0 = arith.cmpi eq, %arg1, %c0_i32 : i32
    %1 = arith.extui %0 : i1 to i32
    %c0_i32_0 = arith.constant 0 : i32
    %2 = arith.cmpi ne, %1, %c0_i32_0 : i32
    scf.if %2 {
      %c0_21 = arith.constant 0 : index
      %c0_22 = arith.constant 0 : index
      %c0_23 = arith.constant 0 : index
      %28 = vector.load %arg3[%c0_21, %c0_22, %c0_23] : memref<4x16x32xbf16, #tpu.memory_space<vmem>>, vector<4x16x32xbf16>
      %cst_24 = arith.constant 2.000000e+00 : bf16
      %29 = vector.broadcast %cst_24 : bf16 to vector<4x16x32xbf16>
      %30 = arith.mulf %29, %28 : vector<4x16x32xbf16>
      %cst_25 = arith.constant 1.000000e+00 : bf16
      %31 = vector.broadcast %cst_25 : bf16 to vector<4x16x32xbf16>
      %32 = arith.subf %30, %31 : vector<4x16x32xbf16>
      %c0_26 = arith.constant 0 : index
      %c0_27 = arith.constant 0 : index
      %c0_28 = arith.constant 0 : index
      %33 = vector.load %arg7[%c0_26, %c0_27, %c0_28] : memref<4x16x32xbf16, #tpu.memory_space<vmem>>, vector<4x16x32xbf16>
      tpu.vector_store %arg7[%c0_26, %c0_27, %c0_28], %32 {strides = array<i32>} : memref<4x16x32xbf16, #tpu.memory_space<vmem>>, vector<4x16x32xbf16>,
    } else {
    }
    %c0 = arith.constant 0 : index
    %c0_1 = arith.constant 0 : index
    %c0_2 = arith.constant 0 : index
    %3 = vector.load %arg2[%c0, %c0_1, %c0_2] : memref<4x16x32xbf16, #tpu.memory_space<vmem>>, vector<4x16x32xbf16>
    %cst = arith.constant 2.000000e+00 : bf16
    %4 = vector.broadcast %cst : bf16 to vector<4x16x32xbf16>
    %5 = arith.mulf %4, %3 : vector<4x16x32xbf16>
    %cst_3 = arith.constant 1.000000e+00 : bf16
    %6 = vector.broadcast %cst_3 : bf16 to vector<4x16x32xbf16>
    %7 = arith.subf %5, %6 : vector<4x16x32xbf16>
    %c0_4 = arith.constant 0 : index
    %c0_5 = arith.constant 0 : index
    %c0_6 = arith.constant 0 : index
    %8 = vector.load %arg7[%c0_4, %c0_5, %c0_6] : memref<4x16x32xbf16, #tpu.memory_space<vmem>>, vector<4x16x32xbf16>
    "tpu.trace_start"() <{level = 10 : i32, message = "bqd,bkd->bqk"}> : () -> ()
    %cst_7 = arith.constant dense<0.000000e+00> : vector<4x16x16xf32>
    %9 = tpu.matmul %7, %8, %cst_7 {dimension_numbers = #tpu.dot_dimension_numbers<[2], [2], [1], [1], [0, 0, 0, 1, 1, 1], [0], [0]>} : vector<4x16x32xbf16>, vector<4x16x32xbf16>, vector<4x16x16xf32> -> vector<4x16x16xf32>
    "tpu.trace_stop"() : () -> ()
    %cst_8 = arith.constant dense<0xFF800000> : vector<4x16xf32>
    %10 = vector.multi_reduction <maximumf>, %9, %cst_8 [2] : vector<4x16x16xf32> to vector<4x16xf32>
    %11 = vector.shape_cast %10 : vector<4x16xf32> to vector<4x16x1xf32>
    %12 = vector.broadcast %11 : vector<4x16x1xf32> to vector<4x16x16xf32>
    %13 = arith.subf %9, %12 : vector<4x16x16xf32>
    %cst_9 = arith.constant 1.562500e-02 : f32
    %14 = vector.broadcast %cst_9 : f32 to vector<4x16x16xf32>
    %15 = arith.mulf %13, %14 : vector<4x16x16xf32>
    %16 = math.exp %15 : vector<4x16x16xf32>
    %cst_10 = arith.constant dense<0.000000e+00> : vector<4x16xf32>
    %17 = vector.multi_reduction <add>, %16, %cst_10 [2] : vector<4x16x16xf32> to vector<4x16xf32>
    %18 = vector.shape_cast %17 : vector<4x16xf32> to vector<4x16x1xf32>
    %19 = tpu.reciprocal %18 {approx = true} : vector<4x16x1xf32> -> vector<4x16x1xf32>
    %20 = vector.broadcast %19 : vector<4x16x1xf32> to vector<4x16x16xf32>
    %21 = arith.mulf %16, %20 : vector<4x16x16xf32>
    %22 = arith.truncf %21 : vector<4x16x16xf32> to vector<4x16x16xbf16>
    %c0_11 = arith.constant 0 : index
    %c0_12 = arith.constant 0 : index
    %c0_13 = arith.constant 0 : index
    %23 = vector.load %arg4[%c0_11, %c0_12, %c0_13] : memref<4x16x32xbf16, #tpu.memory_space<vmem>>, vector<4x16x32xbf16>
    "tpu.trace_start"() <{level = 10 : i32, message = "bqk,bkd->bqd"}> : () -> ()
    %cst_14 = arith.constant dense<0.000000e+00> : vector<4x16x32xf32>
    %24 = tpu.matmul %22, %23, %cst_14 {dimension_numbers = #tpu.dot_dimension_numbers<[2], [1], [1], [2], [0, 0, 0, 1, 1, 2], [0], [0]>} : vector<4x16x16xbf16>, vector<4x16x32xbf16>, vector<4x16x32xf32> -> vector<4x16x32xf32>
    "tpu.trace_stop"() : () -> ()
    %c0_15 = arith.constant 0 : index
    %c0_16 = arith.constant 0 : index
    %c0_17 = arith.constant 0 : index
    %25 = vector.load %arg5[%c0_15, %c0_16, %c0_17] : memref<4x16x32xf32, #tpu.memory_space<vmem>>, vector<4x16x32xf32>
    tpu.vector_store %arg5[%c0_15, %c0_16, %c0_17], %24 {strides = array<i32>} : memref<4x16x32xf32, #tpu.memory_space<vmem>>, vector<4x16x32xf32>,
    %26 = arith.truncf %21 : vector<4x16x16xf32> to vector<4x16x16xbf16>
    %c0_18 = arith.constant 0 : index
    %c0_19 = arith.constant 0 : index
    %c0_20 = arith.constant 0 : index
    %27 = vector.load %arg6[%c0_18, %c0_19, %c0_20] : memref<4x16x16xbf16, #tpu.memory_space<vmem>>, vector<4x16x16xbf16>
    tpu.vector_store %arg6[%c0_18, %c0_19, %c0_20], %26 {strides = array<i32>} : memref<4x16x16xbf16, #tpu.memory_space<vmem>>, vector<4x16x16xbf16>,
    return
  }
  func.func @transform_0(%arg0: i32, %arg1: i32) -> (i32, i32, i32) {
    %c0_i32 = arith.constant 0 : i32
    %c0_i32_0 = arith.constant 0 : i32
    return %arg0, %arg1, %c0_i32 : i32, i32, i32
  }
  func.func @transform_1(%arg0: i32, %arg1: i32) -> (i32, i32, i32) {
    %c0_i32 = arith.constant 0 : i32
    %c0_i32_0 = arith.constant 0 : i32
    %c0_i32_1 = arith.constant 0 : i32
    return %arg0, %c0_i32, %c0_i32_0 : i32, i32, i32
  }
  func.func @transform_2(%arg0: i32, %arg1: i32) -> (i32, i32, i32) {
    %c0_i32 = arith.constant 0 : i32
    %c0_i32_0 = arith.constant 0 : i32
    %c0_i32_1 = arith.constant 0 : i32
    return %arg0, %c0_i32, %c0_i32_0 : i32, i32, i32
  }
  func.func @transform_3(%arg0: i32, %arg1: i32) -> (i32, i32, i32) {
    %c0_i32 = arith.constant 0 : i32
    %c0_i32_0 = arith.constant 0 : i32
    return %arg0, %arg1, %c0_i32 : i32, i32, i32
  }
  func.func @transform_4(%arg0: i32, %arg1: i32) -> (i32, i32, i32) {
    %c0_i32 = arith.constant 0 : i32
    %c0_i32_0 = arith.constant 0 : i32
    return %arg0, %arg1, %c0_i32 : i32, i32, i32
  }
}

</mosaic_0001>

<llo_original>
// kernel: tpu_custom_call.1
$region0: #{tpu_custom_call.1}
  #allocation0 [shape = 'u32[]', space=smem, size = 0x4, offset = 0x4, fixed_abs, tag = 'smem constant byte address 0x4 - core index']
  #allocation1 [shape = 'u32[144,128]{1,0:T(1,128)}', space=vmem, size = 0x12000, scoped, tag = 'internal scratch']
  #allocation2 [shape = 'bf16[4,16,32]{2,1,0:T(16,128)(2,1)}', space=vmem, size = 0x4000, scoped, tag = 'scratch operand']
  %s0 = inlined_call_operand.hbm [shape: bf16[8,16,32], index: 0, kind: input, shape index: {}]
  %s1 = inlined_call_operand.hbm [shape: bf16[8,16,32], index: 1, kind: input, shape index: {}]
  %s2 = inlined_call_operand.hbm [shape: bf16[8,16,32], index: 2, kind: input, shape index: {}]
  %s3 = inlined_call_operand.hbm [shape: f32[8,16,32], index: 3, kind: output, shape index: {0}]
  %s4 = inlined_call_operand.hbm [shape: bf16[8,16,16], index: 4, kind: output, shape index: {1}]
  %5 = xla_tuple %s3, %s4
  %s6 = sld [smem:[#allocation0]]
  $region69: #{tpu_custom_call.1} parent=0
    _
  %s8 = ssub.s32 1, %s6
  %s9 = scalar_select 0, %s8, %s6
  $region1: #{tpu_custom_call.1} parent=0
    #allocation3 [shape = 'u8[32768]{0}', space=vmem, size = 0x8000, scoped, tag = 'input window, operand 0']
    #allocation4 [shape = 's32[2]{0}', space=sflag, size = 0x8, scoped, tag = 'scoped memory for tpu_custom_call.1']
    #allocation5 [shape = 's32[2]{0}', space=sflag, size = 0x8, scoped, tag = 'scoped memory for tpu_custom_call.1']
    #allocation6 [shape = 'u8[32768]{0}', space=vmem, size = 0x8000, scoped, tag = 'input window, operand 1']
    #allocation7 [shape = 's32[2]{0}', space=sflag, size = 0x8, scoped, tag = 'scoped memory for tpu_custom_call.1']
    #allocation8 [shape = 'u8[32768]{0}', space=vmem, size = 0x8000, scoped, tag = 'input window, operand 2']
    #allocation9 [shape = 'u8[65536]{0}', space=vmem, size = 0x10000, scoped, tag = 'output window, operand 0']
    #allocation10 [shape = 'u8[32768]{0}', space=vmem, size = 0x8000, scoped, tag = 'output window, operand 1']
    #allocation11 [shape = 's32[2]{0}', space=sflag, size = 0x8, scoped, tag = 'scoped memory for tpu_custom_call.1']
    %10 = vsyncpa [#allocation4], 0
    %s11 = scalar_lea.sflag [#allocation4], 1
    %12 = vsyncpa %s11, 0
    %13 = vsyncpa [#allocation7], 0
    %s14 = scalar_lea.sflag [#allocation7], 1
    %15 = vsyncpa %s14, 0
    %16 = vsyncpa [#allocation5], 0
    %s17 = scalar_lea.sflag [#allocation5], 1
    %18 = vsyncpa %s17, 0
    %19 = vsyncpa [#allocation11], 0
    %s20 = scalar_lea.sflag [#allocation11], 1
    %21 = vsyncpa %s20, 0
    loop: start=0, step=1, limit=4
    $region2: #{tpu_custom_call.1} parent=1 // loop_pre_header
      _
    $region3: #{tpu_custom_call.1} parent=1 // loop_header
      %s23 = sphi 0, %s27
      %p24 = scmp.ge.s32.totalorder %s23, 4
      %s30 = sphi 0, %s42
      %s31 = sphi 0, %s38
      %s32 = sphi 0, %s30
      %s33 = sphi 0, %s31
      %s34 = sphi 0, %s32
      %s35 = sphi 0, %s33
      %s47 = sphi 0, %s49
      %s50 = sphi 0, %s47
      %s51 = sphi 0, %s50
      %s67 = sphi 0, %s51
      %s73 = sphi 0, %s75
      %s76 = sphi 0, %s73
      %s77 = sphi 0, %s76
      %s93 = sphi 0, %s77
      %s99 = sphi 0, %s101
      %s102 = sphi 0, %s99
      %s103 = sphi 0, %s102
      %s119 = sphi 0, %s103
      %s127 = sphi 0, %s129
      %s130 = sphi 0, %s127
      %s131 = sphi 0, %s130
      %s147 = sphi 0, %s131
      %s155 = sphi 0, %s157
      %s158 = sphi 0, %s155
      %s159 = sphi 0, %s158
      %s175 = sphi 0, %s159
    $region4: #{tpu_custom_call.1} parent=1 // loop_header_branch
      %26 = sbr.rel (%p24) target = $region8
    $region5: #{tpu_custom_call.1} parent=1 // loop_body
      %s28 = ssub.s32 %s23, 1
      %s29 = ssub.s32 %s23, 2
      %s36 = sadd.s32 1, %s31
      %p37 = scmp.ge.s32.totalorder %s36, 1
      %s38 = scalar_select %p37, 0, %s36
      %s39 = sadd.s32 1, %s30
      %s40 = scalar_select %p37, %s39, %s30
      %p41 = scmp.ge.s32.totalorder %s40, 2
      %s42 = scalar_select %p41, 0, %s40
      %s43 = ssub.s32 %s30, %s42
      %s44 = ssub.s32 %s31, %s38
      %s45 = sor.u32 %s43, %s44
      %p46 = scmp.eq.s32.totalorder %s45, 0
      %s48 = sadd.s32 %s47, 1
      %s49 = scalar_select %p46, %s47, %s48
      %p52 = pneg %p46
      %p53 = scmp.eq.s32.totalorder %s23, 1
      %p54 = por %p52, %p53
      %p55 = scmp.ne.s32.totalorder %s47, %s50
      %p56 = scmp.eq.s32.totalorder %s23, 0
      %p57 = por %p55, %p56
      %p58 = scmp.ne.s32.totalorder %s47, %s50
      %p59 = scmp.eq.s32.totalorder %s28, 1
      %p60 = por %p58, %p59
      %p61 = scmp.ne.s32.totalorder %s50, %s51
      %p62 = scmp.eq.s32.totalorder %s28, 0
      %p63 = por %p61, %p62
      %p64 = scmp.ne.s32.totalorder %s50, %s51
      %p65 = scmp.eq.s32.totalorder %s29, 1
      %p66 = por %p64, %p65
      %p68 = scmp.ne.s32.totalorder %s51, %s67
      %p69 = scmp.eq.s32.totalorder %s29, 0
      %p70 = por %p68, %p69
      %s71 = ssub.s32 %s30, %s42
      %p72 = scmp.eq.s32.totalorder %s71, 0
      %s74 = sadd.s32 %s73, 1
      %s75 = scalar_select %p72, %s73, %s74
      %p78 = pneg %p72
      %p79 = scmp.eq.s32.totalorder %s23, 1
      %p80 = por %p78, %p79
      %p81 = scmp.ne.s32.totalorder %s73, %s76
      %p82 = scmp.eq.s32.totalorder %s23, 0
      %p83 = por %p81, %p82
      %p84 = scmp.ne.s32.totalorder %s73, %s76
      %p85 = scmp.eq.s32.totalorder %s28, 1
      %p86 = por %p84, %p85
      %p87 = scmp.ne.s32.totalorder %s76, %s77
      %p88 = scmp.eq.s32.totalorder %s28, 0
      %p89 = por %p87, %p88
      %p90 = scmp.ne.s32.totalorder %s76, %s77
      %p91 = scmp.eq.s32.totalorder %s29, 1
      %p92 = por %p90, %p91
      %p94 = scmp.ne.s32.totalorder %s77, %s93
      %p95 = scmp.eq.s32.totalorder %s29, 0
      %p96 = por %p94, %p95
      %s97 = ssub.s32 %s30, %s42
      %p98 = scmp.eq.s32.totalorder %s97, 0
      %s100 = sadd.s32 %s99, 1
      %s101 = scalar_select %p98, %s99, %s100
      %p104 = pneg %p98
      %p105 = scmp.eq.s32.totalorder %s23, 1
      %p106 = por %p104, %p105
      %p107 = scmp.ne.s32.totalorder %s99, %s102
      %p108 = scmp.eq.s32.totalorder %s23, 0
      %p109 = por %p107, %p108
      %p110 = scmp.ne.s32.totalorder %s99, %s102
      %p111 = scmp.eq.s32.totalorder %s28, 1
      %p112 = por %p110, %p111
      %p113 = scmp.ne.s32.totalorder %s102, %s103
      %p114 = scmp.eq.s32.totalorder %s28, 0
      %p115 = por %p113, %p114
      %p116 = scmp.ne.s32.totalorder %s102, %s103
      %p117 = scmp.eq.s32.totalorder %s29, 1
      %p118 = por %p116, %p117
      %p120 = scmp.ne.s32.totalorder %s103, %s119
      %p121 = scmp.eq.s32.totalorder %s29, 0
      %p122 = por %p120, %p121
      %s123 = ssub.s32 %s30, %s42
      %s124 = ssub.s32 %s31, %s38
      %s125 = sor.u32 %s123, %s124
      %p126 = scmp.eq.s32.totalorder %s125, 0
      %s128 = sadd.s32 %s127, 1
      %s129 = scalar_select %p126, %s127, %s128
      %p132 = pneg %p126
      %p133 = scmp.eq.s32.totalorder %s23, 1
      %p134 = por %p132, %p133
      %p135 = scmp.ne.s32.totalorder %s127, %s130
      %p136 = scmp.eq.s32.totalorder %s23, 0
      %p137 = por %p135, %p136
      %p138 = scmp.ne.s32.totalorder %s127, %s130
      %p139 = scmp.eq.s32.totalorder %s28, 1
      %p140 = por %p138, %p139
      %p141 = scmp.ne.s32.totalorder %s130, %s131
      %p142 = scmp.eq.s32.totalorder %s28, 0
      %p143 = por %p141, %p142
      %p144 = scmp.ne.s32.totalorder %s130, %s131
      %p145 = scmp.eq.s32.totalorder %s29, 1
      %p146 = por %p144, %p145
      %p148 = scmp.ne.s32.totalorder %s131, %s147
      %p149 = scmp.eq.s32.totalorder %s29, 0
      %p150 = por %p148, %p149
      %s151 = ssub.s32 %s30, %s42
      %s152 = ssub.s32 %s31, %s38
      %s153 = sor.u32 %s151, %s152
      %p154 = scmp.eq.s32.totalorder %s153, 0
      %s156 = sadd.s32 %s155, 1
      %s157 = scalar_select %p154, %s155, %s156
      %p160 = pneg %p154
      %p161 = scmp.eq.s32.totalorder %s23, 1
      %p162 = por %p160, %p161
      %p163 = scmp.ne.s32.totalorder %s155, %s158
      %p164 = scmp.eq.s32.totalorder %s23, 0
      %p165 = por %p163, %p164
      %p166 = scmp.ne.s32.totalorder %s155, %s158
      %p167 = scmp.eq.s32.totalorder %s28, 1
      %p168 = por %p166, %p167
      %p169 = scmp.ne.s32.totalorder %s158, %s159
      %p170 = scmp.eq.s32.totalorder %s28, 0
      %p171 = por %p169, %p170
      %p172 = scmp.ne.s32.totalorder %s158, %s159
      %p173 = scmp.eq.s32.totalorder %s29, 1
      %p174 = por %p172, %p173
      %p176 = scmp.ne.s32.totalorder %s159, %s175
      %p177 = scmp.eq.s32.totalorder %s29, 0
      %p178 = por %p176, %p177
      %p179 = scmp.le.s32.totalorder 1, %s23
      %p180 = scmp.lt.s32.totalorder %s23, 3
      %p181 = pnand %p179, %p180
      %p182 = pneg %p181
      // Predicated region
      $region9: #{tpu_custom_call.1} parent=5 // pred_check
        _
      $region10: #{tpu_custom_call.1} parent=5 // pred_check_branch
        %184 = sbr.rel (%p181) target = $region12
      $region11: #{tpu_custom_call.1} parent=5 // pred_region
        %s185 = ssub.s32 %s23, 1
      $region12: #{tpu_custom_call.1} parent=5 // pred_fallthru
        _
      %p186 = scmp.lt.s32.totalorder %s23, 2
      // Predicated region
      $region13: #{tpu_custom_call.1} parent=5 // pred_check
        %p187 = pneg %p186
      $region14: #{tpu_custom_call.1} parent=5 // pred_check_branch
        %189 = sbr.rel (%p187) target = $region16
      $region15: #{tpu_custom_call.1} parent=5 // pred_region
        // Predicated region
        $region17: #{tpu_custom_call.1} parent=15 // pred_check
          %p190 = pneg %p57
        $region18: #{tpu_custom_call.1} parent=15 // pred_check_branch
          %192 = sbr.rel (%p190) target = $region20
        $region19: #{tpu_custom_call.1} parent=15 // pred_region
          %s193 = sand.u32 %s47, 1
          %s194 = scalar_lea.sflag [#allocation4], %s193
          %s195 = sand.u32 %s47, 1
          %s196 = smul.addr %s195, 32
          %s197 = scalar_lea.vmem [#allocation3], %s196
          %s198 = smul.u32 4, %s30
          %s199 = smul.u32 2, %s31
          %s201 = ssub.s32 512, 512
          %202 = vsyncadd %s194, %s201
          %s203 = smul.addr %s198, 2
          %s204 = sadd.s32 %s199, %s203
          %s205 = smul.addr %s204, 64
          %s206 = scalar_lea.hbm %s0, %s205
          %s207 = sshll.u32 %s197, 4
          %s208 = int_to_ptr.vmem [resolvable:$true] %s207
          %213 = dma.hbm_to_vmem [thread:$0]  %s206, 512, %s208, %s194, 64, 64, 4
        $region20: #{tpu_custom_call.1} parent=15 // pred_fallthru
          _
        // Predicated region
        $region21: #{tpu_custom_call.1} parent=15 // pred_check
          %p214 = pneg %p83
        $region22: #{tpu_custom_call.1} parent=15 // pred_check_branch
          %216 = sbr.rel (%p214) target = $region24
        $region23: #{tpu_custom_call.1} parent=15 // pred_region
          %s217 = sand.u32 %s23, 1
          %s218 = scalar_lea.sflag [#allocation7], %s217
          %s219 = sand.u32 %s73, 1
          %s220 = smul.addr %s219, 32
          %s221 = scalar_lea.vmem [#allocation6], %s220
          %s222 = smul.u32 4, %s30
          %s224 = ssub.s32 512, 512
          %225 = vsyncadd %s218, %s224
          %s226 = smul.addr %s222, 2
          %s227 = smul.addr %s226, 64
          %s228 = scalar_lea.hbm %s1, %s227
          %s229 = sshll.u32 %s221, 4
          %s230 = int_to_ptr.vmem [resolvable:$true] %s229
          %235 = dma.hbm_to_vmem [thread:$0]  %s228, 512, %s230, %s218, 64, 64, 4
        $region24: #{tpu_custom_call.1} parent=15 // pred_fallthru
          _
        // Predicated region
        $region25: #{tpu_custom_call.1} parent=15 // pred_check
          %p236 = pneg %p109
        $region26: #{tpu_custom_call.1} parent=15 // pred_check_branch
          %238 = sbr.rel (%p236) target = $region28
        $region27: #{tpu_custom_call.1} parent=15 // pred_region
          %s239 = sand.u32 %s23, 1
          %s240 = scalar_lea.sflag [#allocation7], %s239
          %s241 = sand.u32 %s99, 1
          %s242 = smul.addr %s241, 32
          %s243 = scalar_lea.vmem [#allocation8], %s242
          %s244 = smul.u32 4, %s30
          %s246 = ssub.s32 512, 512
          %247 = vsyncadd %s240, %s246
          %s248 = smul.addr %s244, 2
          %s249 = smul.addr %s248, 64
          %s250 = scalar_lea.hbm %s2, %s249
          %s251 = sshll.u32 %s243, 4
          %s252 = int_to_ptr.vmem [resolvable:$true] %s251
          %257 = dma.hbm_to_vmem [thread:$0]  %s250, 512, %s252, %s240, 64, 64, 4
        $region28: #{tpu_custom_call.1} parent=15 // pred_fallthru
          _
      $region16: #{tpu_custom_call.1} parent=5 // pred_fallthru
        _
      %p258 = scmp.le.s32.totalorder 1, %s23
      %p259 = scmp.lt.s32.totalorder %s23, 3
      %p260 = pnand %p258, %p259
      %p261 = pneg %p260
      // Predicated region
      $region29: #{tpu_custom_call.1} parent=5 // pred_check
        _
      $region30: #{tpu_custom_call.1} parent=5 // pred_check_branch
        %263 = sbr.rel (%p260) target = $region32
      $region31: #{tpu_custom_call.1} parent=5 // pred_region
        %s264 = ssub.s32 %s23, 1
        %s265 = sand.u32 %s50, 1
        %s266 = scalar_lea.sflag [#allocation4], %s265
        %s267 = sand.u32 %s50, 1
        %s268 = smul.addr %s267, 32
        %s269 = scalar_lea.vmem [#allocation3], %s268
        // Predicated region
        $region33: #{tpu_custom_call.1} parent=31 // pred_check
          %p270 = pneg %p63
        $region34: #{tpu_custom_call.1} parent=31 // pred_check_branch
          %272 = sbr.rel (%p270) target = $region36
        $region35: #{tpu_custom_call.1} parent=31 // pred_region
          %273 = dma.done %s266, 512
        $region36: #{tpu_custom_call.1} parent=31 // pred_fallthru
          _
        %s274 = sand.u32 %s28, 1
        %s275 = scalar_lea.sflag [#allocation7], %s274
        %s276 = sand.u32 %s76, 1
        %s277 = smul.addr %s276, 32
        %s278 = scalar_lea.vmem [#allocation6], %s277
        // Predicated region
        $region37: #{tpu_custom_call.1} parent=31 // pred_check
          %p279 = pneg %p89
        $region38: #{tpu_custom_call.1} parent=31 // pred_check_branch
          %281 = sbr.rel (%p279) target = $region40
        $region39: #{tpu_custom_call.1} parent=31 // pred_region
          %282 = dma.done %s275, 512
        $region40: #{tpu_custom_call.1} parent=31 // pred_fallthru
          _
        %s283 = sand.u32 %s28, 1
        %s284 = scalar_lea.sflag [#allocation7], %s283
        %s285 = sand.u32 %s102, 1
        %s286 = smul.addr %s285, 32
        %s287 = scalar_lea.vmem [#allocation8], %s286
        // Predicated region
        $region41: #{tpu_custom_call.1} parent=31 // pred_check
          %p288 = pneg %p115
        $region42: #{tpu_custom_call.1} parent=31 // pred_check_branch
          %290 = sbr.rel (%p288) target = $region44
        $region43: #{tpu_custom_call.1} parent=31 // pred_region
          %291 = dma.done %s284, 512
        $region44: #{tpu_custom_call.1} parent=31 // pred_fallthru
          _
        %s292 = sand.u32 %s50, 1
        %s293 = scalar_lea.sflag [#allocation4], %s292
        %s294 = sand.u32 %s50, 1
        %s295 = smul.addr %s294, 32
        %s296 = scalar_lea.vmem [#allocation3], %s295
        %p297 = pneg %p63
        %p298 = pneg %p60
        %s299 = sand.u32 %s28, 1
        %s300 = scalar_lea.sflag [#allocation7], %s299
        %s301 = sand.u32 %s76, 1
        %s302 = smul.addr %s301, 32
        %s303 = scalar_lea.vmem [#allocation6], %s302
        %p304 = pneg %p89
        %p305 = pneg %p86
        %s306 = sand.u32 %s28, 1
        %s307 = scalar_lea.sflag [#allocation7], %s306
        %s308 = sand.u32 %s102, 1
        %s309 = smul.addr %s308, 32
        %s310 = scalar_lea.vmem [#allocation8], %s309
        %p311 = pneg %p115
        %p312 = pneg %p112
        %p313 = pneg %p143
        %p314 = pneg %p140
        %s315 = sand.u32 %s130, 1
        %s316 = scalar_lea.sflag [#allocation5], %s315
        %s317 = sand.u32 %s130, 1
        %s318 = smul.addr %s317, 64
        %s319 = scalar_lea.vmem [#allocation9], %s318
        %p320 = pneg %p171
        %p321 = pneg %p168
        %s322 = sand.u32 %s158, 1
        %s323 = scalar_lea.sflag [#allocation11], %s322
        %s324 = sand.u32 %s158, 1
        %s325 = smul.addr %s324, 32
        %s326 = scalar_lea.vmem [#allocation10], %s325
        %s327 = smul.u32 4, %s32
        %s328 = smul.u32 2, %s33
        %s329 = smul.u32 4, %s32
        %s330 = smul.u32 4, %s32
        %s331 = smul.u32 4, %s32
        %s332 = smul.u32 2, %s33
        %s333 = smul.u32 4, %s32
        %s334 = smul.u32 2, %s33
        %p338 = scmp.eq.s32.totalorder %s33, 0
        // Predicated region
        $region45: #{tpu_custom_call.1} parent=31 // pred_check
          %p339 = pneg %p338
        $region46: #{tpu_custom_call.1} parent=31 // pred_check_branch
          %341 = sbr.rel (%p339) target = $region48
        $region47: #{tpu_custom_call.1} parent=31 // pred_region
          %v342 = vld [vmem:[%s278] sm:$0xf]
          %v343 = vld [vmem:[%s278 + $0x4] sm:$0xf]
          %v344 = vld [vmem:[%s278 + $0x8] sm:$0xf]
          %v345 = vld [vmem:[%s278 + $0xc] sm:$0xf]
          %v346 = vld [vmem:[%s278 + $0x10] sm:$0xf]
          %v347 = vld [vmem:[%s278 + $0x14] sm:$0xf]
          %v348 = vld [vmem:[%s278 + $0x18] sm:$0xf]
          %v349 = vld [vmem:[%s278 + $0x1c] sm:$0xf]
          %v350 = vmul.bf16 %v342, 1073758208
          %v351 = vmul.bf16 %v343, 1073758208
          %v352 = vmul.bf16 %v344, 1073758208
          %v353 = vmul.bf16 %v345, 1073758208
          %v354 = vmul.bf16 %v346, 1073758208
          %v355 = vmul.bf16 %v347, 1073758208
          %v356 = vmul.bf16 %v348, 1073758208
          %v357 = vmul.bf16 %v349, 1073758208
          %v358 = vsub.bf16 %v350, 1065369472
          %v359 = vsub.bf16 %v351, 1065369472
          %v360 = vsub.bf16 %v352, 1065369472
          %v361 = vsub.bf16 %v353, 1065369472
          %v362 = vsub.bf16 %v354, 1065369472
          %v363 = vsub.bf16 %v355, 1065369472
          %v364 = vsub.bf16 %v356, 1065369472
          %v365 = vsub.bf16 %v357, 1065369472
          %v374 = vunpack.c.l.b16 %v358
          %v375 = vunpack.c.l.b16 %v359
          %v376 = vunpack.c.l.b16 %v360
          %v377 = vunpack.c.l.b16 %v361
          %v378 = vunpack.c.l.b16 %v362
          %v379 = vunpack.c.l.b16 %v363
          %v380 = vunpack.c.l.b16 %v364
          %v381 = vunpack.c.l.b16 %v365
          %v382 = vpack.c.b16 %v375, %v374
          %v383 = vpack.c.b16 %v377, %v376
          %v384 = vpack.c.b16 %v379, %v378
          %v385 = vpack.c.b16 %v381, %v380
          %vm390 = vcmask 261120
          %391 = vst.msk [vmem:[#allocation2] sm:$0xff] %vm390, %v382
          %392 = vst.msk [vmem:[#allocation2 + $0x8] sm:$0xff] %vm390, %v383
          %393 = vst.msk [vmem:[#allocation2 + $0x10] sm:$0xff] %vm390, %v384
          %394 = vst.msk [vmem:[#allocation2 + $0x18] sm:$0xff] %vm390, %v385
        $region48: #{tpu_custom_call.1} parent=31 // pred_fallthru
          _
        %v395 = vld [vmem:[%s269] sm:$0xf]
        %v396 = vld [vmem:[%s269 + $0x4] sm:$0xf]
        %v397 = vld [vmem:[%s269 + $0x8] sm:$0xf]
        %v398 = vld [vmem:[%s269 + $0xc] sm:$0xf]
        %v399 = vld [vmem:[%s269 + $0x10] sm:$0xf]
        %v400 = vld [vmem:[%s269 + $0x14] sm:$0xf]
        %v401 = vld [vmem:[%s269 + $0x18] sm:$0xf]
        %v402 = vld [vmem:[%s269 + $0x1c] sm:$0xf]
        %v403 = vmul.bf16 %v395, 1073758208
        %v404 = vmul.bf16 %v396, 1073758208
        %v405 = vmul.bf16 %v397, 1073758208
        %v406 = vmul.bf16 %v398, 1073758208
        %v407 = vmul.bf16 %v399, 1073758208
        %v408 = vmul.bf16 %v400, 1073758208
        %v409 = vmul.bf16 %v401, 1073758208
        %v410 = vmul.bf16 %v402, 1073758208
        %v411 = vsub.bf16 %v403, 1065369472
        %v412 = vsub.bf16 %v404, 1065369472
        %v413 = vsub.bf16 %v405, 1065369472
        %v414 = vsub.bf16 %v406, 1065369472
        %v415 = vsub.bf16 %v407, 1065369472
        %v416 = vsub.bf16 %v408, 1065369472
        %v417 = vsub.bf16 %v409, 1065369472
        %v418 = vsub.bf16 %v410, 1065369472
        %v419 = vld [vmem:[#allocation2] sm:$0xff]
        %v420 = vld [vmem:[#allocation2 + $0x8] sm:$0xff]
        %v421 = vld [vmem:[#allocation2 + $0x10] sm:$0xff]
        %v422 = vld [vmem:[#allocation2 + $0x18] sm:$0xff]
        %v425 = vunpack.c.l.b16 %v411
        %v426 = vunpack.c.l.b16 %v412
        %v427 = vpack.c.b16 %v426, %v425
        %vm428 = vcmask 261120
        %v430 = vsel %vm428, %v427, 0
        %v433 = vsel %vm428, %v419, 0
        %435 = vmatprep.subr.bf16.mxu0 0
        %436 = vmatpush1.bf16.xpose.msra.mxu0 %v433
        %437 = vmatprep.subr.bf16.mxu0 0
        %438 = vmatpush1.bf16.xpose.msra.mxu0 0
        %439 = vmatprep.subr.bf16.mxu0 0
        %440 = vmatpush1.bf16.xpose.msra.mxu0 0
        %441 = vmatprep.subr.bf16.mxu0 0
        %442 = vmatpush1.bf16.xpose.msra.mxu0 0
        %443 = vmatprep.subr.bf16.mxu0 0
        %444 = vmatpush1.bf16.xpose.msra.mxu0 0
        %445 = vmatprep.subr.bf16.mxu0 0
        %446 = vmatpush1.bf16.xpose.msra.mxu0 0
        %447 = vmatprep.subr.bf16.mxu0 0
        %448 = vmatpush1.bf16.xpose.msra.mxu0 0
        %449 = vmatprep.subr.bf16.mxu0 0
        %450 = vmatpush1.bf16.xpose.msra.mxu0 0
        %451 = vmatprep.subr.bf16.mxu0 0
        %452 = vmatpush1.bf16.xpose.msra.mxu0 0
        %453 = vmatprep.subr.bf16.mxu0 0
        %454 = vmatpush1.bf16.xpose.msra.mxu0 0
        %455 = vmatprep.subr.bf16.mxu0 0
        %456 = vmatpush1.bf16.xpose.msra.mxu0 0
        %457 = vmatprep.subr.bf16.mxu0 0
        %458 = vmatpush1.bf16.xpose.msra.mxu0 0
        %459 = vmatprep.subr.bf16.mxu0 0
        %460 = vmatpush1.bf16.xpose.msra.mxu0 0
        %461 = vmatprep.subr.bf16.mxu0 0
        %462 = vmatpush1.bf16.xpose.msra.mxu0 0
        %463 = vmatprep.subr.bf16.mxu0 0
        %464 = vmatpush1.bf16.xpose.msra.mxu0 0
        %465 = vmatprep.subr.bf16.mxu0 0
        %466 = vmatpush1.bf16.xpose.msra.mxu0 0
        %467 = vmatprep.mubr.bf16.mxu0 0
        %468 = vmatmul.mubr.bf16.gmra.mrb[0].mxu0 %v430
        %v469 = vpop.f32.mrb[0].mxu0
        %v470 = vadd.f32 0.0, %v469
        %v471 = vpop.f32.mrb[0].mxu0
        %v472 = vpop.f32.mrb[0].mxu0
        %v473 = vadd.f32 0.0, %v472
        %v474 = vpop.f32.mrb[0].mxu0
        %475 = vdwg.mxu0
        %v478 = vunpack.c.l.b16 %v413
        %v479 = vunpack.c.l.b16 %v414
        %v480 = vpack.c.b16 %v479, %v478
        %v482 = vsel %vm428, %v480, 0
        %v485 = vsel %vm428, %v420, 0
        %487 = vmatprep.subr.bf16.mxu0 0
        %488 = vmatpush1.bf16.xpose.msra.mxu0 %v485
        %489 = vmatprep.subr.bf16.mxu0 0
        %490 = vmatpush1.bf16.xpose.msra.mxu0 0
        %491 = vmatprep.subr.bf16.mxu0 0
        %492 = vmatpush1.bf16.xpose.msra.mxu0 0
        %493 = vmatprep.subr.bf16.mxu0 0
        %494 = vmatpush1.bf16.xpose.msra.mxu0 0
        %495 = vmatprep.subr.bf16.mxu0 0
        %496 = vmatpush1.bf16.xpose.msra.mxu0 0
        %497 = vmatprep.subr.bf16.mxu0 0
        %498 = vmatpush1.bf16.xpose.msra.mxu0 0
        %499 = vmatprep.subr.bf16.mxu0 0
        %500 = vmatpush1.bf16.xpose.msra.mxu0 0
        %501 = vmatprep.subr.bf16.mxu0 0
        %502 = vmatpush1.bf16.xpose.msra.mxu0 0
        %503 = vmatprep.subr.bf16.mxu0 0
        %504 = vmatpush1.bf16.xpose.msra.mxu0 0
        %505 = vmatprep.subr.bf16.mxu0 0
        %506 = vmatpush1.bf16.xpose.msra.mxu0 0
        %507 = vmatprep.subr.bf16.mxu0 0
        %508 = vmatpush1.bf16.xpose.msra.mxu0 0
        %509 = vmatprep.subr.bf16.mxu0 0
        %510 = vmatpush1.bf16.xpose.msra.mxu0 0
        %511 = vmatprep.subr.bf16.mxu0 0
        %512 = vmatpush1.bf16.xpose.msra.mxu0 0
        %513 = vmatprep.subr.bf16.mxu0 0
        %514 = vmatpush1.bf16.xpose.msra.mxu0 0
        %515 = vmatprep.subr.bf16.mxu0 0
        %516 = vmatpush1.bf16.xpose.msra.mxu0 0
        %517 = vmatprep.subr.bf16.mxu0 0
        %518 = vmatpush1.bf16.xpose.msra.mxu0 0
        %519 = vmatprep.mubr.bf16.mxu0 0
        %520 = vmatmul.mubr.bf16.gmra.mrb[0].mxu0 %v482
        %v521 = vpop.f32.mrb[0].mxu0
        %v522 = vadd.f32 0.0, %v521
        %v523 = vpop.f32.mrb[0].mxu0
        %v524 = vpop.f32.mrb[0].mxu0
        %v525 = vadd.f32 0.0, %v524
        %v526 = vpop.f32.mrb[0].mxu0
        %527 = vdwg.mxu0
        %v530 = vunpack.c.l.b16 %v415
        %v531 = vunpack.c.l.b16 %v416
        %v532 = vpack.c.b16 %v531, %v530
        %v534 = vsel %vm428, %v532, 0
        %v537 = vsel %vm428, %v421, 0
        %539 = vmatprep.subr.bf16.mxu0 0
        %540 = vmatpush1.bf16.xpose.msra.mxu0 %v537
        %541 = vmatprep.subr.bf16.mxu0 0
        %542 = vmatpush1.bf16.xpose.msra.mxu0 0
        %543 = vmatprep.subr.bf16.mxu0 0
        %544 = vmatpush1.bf16.xpose.msra.mxu0 0
        %545 = vmatprep.subr.bf16.mxu0 0
        %546 = vmatpush1.bf16.xpose.msra.mxu0 0
        %547 = vmatprep.subr.bf16.mxu0 0
        %548 = vmatpush1.bf16.xpose.msra.mxu0 0
        %549 = vmatprep.subr.bf16.mxu0 0
        %550 = vmatpush1.bf16.xpose.msra.mxu0 0
        %551 = vmatprep.subr.bf16.mxu0 0
        %552 = vmatpush1.bf16.xpose.msra.mxu0 0
        %553 = vmatprep.subr.bf16.mxu0 0
        %554 = vmatpush1.bf16.xpose.msra.mxu0 0
        %555 = vmatprep.subr.bf16.mxu0 0
        %556 = vmatpush1.bf16.xpose.msra.mxu0 0
        %557 = vmatprep.subr.bf16.mxu0 0
        %558 = vmatpush1.bf16.xpose.msra.mxu0 0
        %559 = vmatprep.subr.bf16.mxu0 0
        %560 = vmatpush1.bf16.xpose.msra.mxu0 0
        %561 = vmatprep.subr.bf16.mxu0 0
        %562 = vmatpush1.bf16.xpose.msra.mxu0 0
        %563 = vmatprep.subr.bf16.mxu0 0
        %564 = vmatpush1.bf16.xpose.msra.mxu0 0
        %565 = vmatprep.subr.bf16.mxu0 0
        %566 = vmatpush1.bf16.xpose.msra.mxu0 0
        %567 = vmatprep.subr.bf16.mxu0 0
        %568 = vmatpush1.bf16.xpose.msra.mxu0 0
        %569 = vmatprep.subr.bf16.mxu0 0
        %570 = vmatpush1.bf16.xpose.msra.mxu0 0
        %571 = vmatprep.mubr.bf16.mxu0 0
        %572 = vmatmul.mubr.bf16.gmra.mrb[0].mxu0 %v534
        %v573 = vpop.f32.mrb[0].mxu0
        %v574 = vadd.f32 0.0, %v573
        %v575 = vpop.f32.mrb[0].mxu0
        %v576 = vpop.f32.mrb[0].mxu0
        %v577 = vadd.f32 0.0, %v576
        %v578 = vpop.f32.mrb[0].mxu0
        %579 = vdwg.mxu0
        %v582 = vunpack.c.l.b16 %v417
        %v583 = vunpack.c.l.b16 %v418
        %v584 = vpack.c.b16 %v583, %v582
        %v586 = vsel %vm428, %v584, 0
        %v589 = vsel %vm428, %v422, 0
        %591 = vmatprep.subr.bf16.mxu0 0
        %592 = vmatpush1.bf16.xpose.msra.mxu0 %v589
        %593 = vmatprep.subr.bf16.mxu0 0
        %594 = vmatpush1.bf16.xpose.msra.mxu0 0
        %595 = vmatprep.subr.bf16.mxu0 0
        %596 = vmatpush1.bf16.xpose.msra.mxu0 0
        %597 = vmatprep.subr.bf16.mxu0 0
        %598 = vmatpush1.bf16.xpose.msra.mxu0 0
        %599 = vmatprep.subr.bf16.mxu0 0
        %600 = vmatpush1.bf16.xpose.msra.mxu0 0
        %601 = vmatprep.subr.bf16.mxu0 0
        %602 = vmatpush1.bf16.xpose.msra.mxu0 0
        %603 = vmatprep.subr.bf16.mxu0 0
        %604 = vmatpush1.bf16.xpose.msra.mxu0 0
        %605 = vmatprep.subr.bf16.mxu0 0
        %606 = vmatpush1.bf16.xpose.msra.mxu0 0
        %607 = vmatprep.subr.bf16.mxu0 0
        %608 = vmatpush1.bf16.xpose.msra.mxu0 0
        %609 = vmatprep.subr.bf16.mxu0 0
        %610 = vmatpush1.bf16.xpose.msra.mxu0 0
        %611 = vmatprep.subr.bf16.mxu0 0
        %612 = vmatpush1.bf16.xpose.msra.mxu0 0
        %613 = vmatprep.subr.bf16.mxu0 0
        %614 = vmatpush1.bf16.xpose.msra.mxu0 0
        %615 = vmatprep.subr.bf16.mxu0 0
        %616 = vmatpush1.bf16.xpose.msra.mxu0 0
        %617 = vmatprep.subr.bf16.mxu0 0
        %618 = vmatpush1.bf16.xpose.msra.mxu0 0
        %619 = vmatprep.subr.bf16.mxu0 0
        %620 = vmatpush1.bf16.xpose.msra.mxu0 0
        %621 = vmatprep.subr.bf16.mxu0 0
        %622 = vmatpush1.bf16.xpose.msra.mxu0 0
        %623 = vmatprep.mubr.bf16.mxu0 0
        %624 = vmatmul.mubr.bf16.gmra.mrb[0].mxu0 %v586
        %v625 = vpop.f32.mrb[0].mxu0
        %v626 = vadd.f32 0.0, %v625
        %v627 = vpop.f32.mrb[0].mxu0
        %v628 = vpop.f32.mrb[0].mxu0
        %v629 = vadd.f32 0.0, %v628
        %v630 = vpop.f32.mrb[0].mxu0
        %631 = vdwg.mxu0
        %vm632 = vcmask 130048
        %v633 = vsel %vm632, %v470, -inf
        %634 = vmax.xlane.f32.xlu0 %v633
        %v635 = vpop.xlane.xlu0 %634
        %v636 = vsel %vm632, %v473, -inf
        %637 = vmax.xlane.f32.xlu0 %v636
        %v638 = vpop.xlane.xlu0 %637
        %v639 = vsel %vm632, %v522, -inf
        %640 = vmax.xlane.f32.xlu0 %v639
        %v641 = vpop.xlane.xlu0 %640
        %v642 = vsel %vm632, %v525, -inf
        %643 = vmax.xlane.f32.xlu0 %v642
        %v644 = vpop.xlane.xlu0 %643
        %v645 = vsel %vm632, %v574, -inf
        %646 = vmax.xlane.f32.xlu0 %v645
        %v647 = vpop.xlane.xlu0 %646
        %v648 = vsel %vm632, %v577, -inf
        %649 = vmax.xlane.f32.xlu0 %v648
        %v650 = vpop.xlane.xlu0 %649
        %v651 = vsel %vm632, %v626, -inf
        %652 = vmax.xlane.f32.xlu0 %v651
        %v653 = vpop.xlane.xlu0 %652
        %v654 = vsel %vm632, %v629, -inf
        %655 = vmax.xlane.f32.xlu0 %v654
        %v656 = vpop.xlane.xlu0 %655
        %v657 = vsub.f32 %v470, %v635
        %v658 = vsub.f32 %v473, %v638
        %v659 = vsub.f32 %v522, %v641
        %v660 = vsub.f32 %v525, %v644
        %v661 = vsub.f32 %v574, %v647
        %v662 = vsub.f32 %v577, %v650
        %v663 = vsub.f32 %v626, %v653
        %v664 = vsub.f32 %v629, %v656
        %v665 = vmul.f32 %v657, 0.015625
        %v666 = vmul.f32 %v658, 0.015625
        %v667 = vmul.f32 %v659, 0.015625
        %v668 = vmul.f32 %v660, 0.015625
        %v669 = vmul.f32 %v661, 0.015625
        %v670 = vmul.f32 %v662, 0.015625
        %v671 = vmul.f32 %v663, 0.015625
        %v672 = vmul.f32 %v664, 0.015625
        %v673 = vmul.f32 %v665, 1.442695
        %v674 = vpow.pop %v673
        %v675 = vmul.f32 %v666, 1.442695
        %v676 = vpow.pop %v675
        %v677 = vmul.f32 %v667, 1.442695
        %v678 = vpow.pop %v677
        %v679 = vmul.f32 %v668, 1.442695
        %v680 = vpow.pop %v679
        %v681 = vmul.f32 %v669, 1.442695
        %v682 = vpow.pop %v681
        %v683 = vmul.f32 %v670, 1.442695
        %v684 = vpow.pop %v683
        %v685 = vmul.f32 %v671, 1.442695
        %v686 = vpow.pop %v685
        %v687 = vmul.f32 %v672, 1.442695
        %v688 = vpow.pop %v687
        %v689 = vsel %vm632, %v674, 0.0
        %690 = vadd.xlane.f32.xlu0 %v689
        %v691 = vpop.xlane.xlu0 %690
        %v692 = vsel %vm632, %v676, 0.0
        %693 = vadd.xlane.f32.xlu0 %v692
        %v694 = vpop.xlane.xlu0 %693
        %v695 = vsel %vm632, %v678, 0.0
        %696 = vadd.xlane.f32.xlu0 %v695
        %v697 = vpop.xlane.xlu0 %696
        %v698 = vsel %vm632, %v680, 0.0
        %699 = vadd.xlane.f32.xlu0 %v698
        %v700 = vpop.xlane.xlu0 %699
        %v701 = vsel %vm632, %v682, 0.0
        %702 = vadd.xlane.f32.xlu0 %v701
        %v703 = vpop.xlane.xlu0 %702
        %v704 = vsel %vm632, %v684, 0.0
        %705 = vadd.xlane.f32.xlu0 %v704
        %v706 = vpop.xlane.xlu0 %705
        %v707 = vsel %vm632, %v686, 0.0
        %708 = vadd.xlane.f32.xlu0 %v707
        %v709 = vpop.xlane.xlu0 %708
        %v710 = vsel %vm632, %v688, 0.0
        %711 = vadd.xlane.f32.xlu0 %v710
        %v712 = vpop.xlane.xlu0 %711
        %v713 = vrcp.pop %v691
        %v714 = vrcp.pop %v694
        %v715 = vrcp.pop %v697
        %v716 = vrcp.pop %v700
        %v717 = vrcp.pop %v703
        %v718 = vrcp.pop %v706
        %v719 = vrcp.pop %v709
        %v720 = vrcp.pop %v712
        %v721 = vmul.f32 %v674, %v713
        %v722 = vmul.f32 %v676, %v714
        %v723 = vmul.f32 %v678, %v715
        %v724 = vmul.f32 %v680, %v716
        %v725 = vmul.f32 %v682, %v717
        %v726 = vmul.f32 %v684, %v718
        %v727 = vmul.f32 %v686, %v719
        %v728 = vmul.f32 %v688, %v720
        %v729 = vpack.c.bf16 %v722, %v721
        %v730 = vpack.c.bf16 %v724, %v723
        %v731 = vpack.c.bf16 %v726, %v725
        %v732 = vpack.c.bf16 %v728, %v727
        %v733 = vld [vmem:[%s287] sm:$0xf]
        %v734 = vld [vmem:[%s287 + $0x4] sm:$0xf]
        %v735 = vld [vmem:[%s287 + $0x8] sm:$0xf]
        %v736 = vld [vmem:[%s287 + $0xc] sm:$0xf]
        %v737 = vld [vmem:[%s287 + $0x10] sm:$0xf]
        %v738 = vld [vmem:[%s287 + $0x14] sm:$0xf]
        %v739 = vld [vmem:[%s287 + $0x18] sm:$0xf]
        %v740 = vld [vmem:[%s287 + $0x1c] sm:$0xf]
        %v743 = vunpack.c.l.b16 %v733
        %v744 = vunpack.c.l.b16 %v734
        %v745 = vpack.c.b16 %v744, %v743
        %v748 = vsel %vm632, %v729, 0
        %750 = vmatprep.subr.bf16.mxu0 0
        %751 = vmatpush1.bf16.msra.mxu0 %v745
        %752 = vmatprep.subr.bf16.mxu0 0
        %753 = vmatpush1.bf16.msra.mxu0 0
        %754 = vmatprep.subr.bf16.mxu0 0
        %755 = vmatpush1.bf16.msra.mxu0 0
        %756 = vmatprep.subr.bf16.mxu0 0
        %757 = vmatpush1.bf16.msra.mxu0 0
        %758 = vmatprep.subr.bf16.mxu0 0
        %759 = vmatpush1.bf16.msra.mxu0 0
        %760 = vmatprep.subr.bf16.mxu0 0
        %761 = vmatpush1.bf16.msra.mxu0 0
        %762 = vmatprep.subr.bf16.mxu0 0
        %763 = vmatpush1.bf16.msra.mxu0 0
        %764 = vmatprep.subr.bf16.mxu0 0
        %765 = vmatpush1.bf16.msra.mxu0 0
        %766 = vmatprep.subr.bf16.mxu0 0
        %767 = vmatpush1.bf16.msra.mxu0 0
        %768 = vmatprep.subr.bf16.mxu0 0
        %769 = vmatpush1.bf16.msra.mxu0 0
        %770 = vmatprep.subr.bf16.mxu0 0
        %771 = vmatpush1.bf16.msra.mxu0 0
        %772 = vmatprep.subr.bf16.mxu0 0
        %773 = vmatpush1.bf16.msra.mxu0 0
        %774 = vmatprep.subr.bf16.mxu0 0
        %775 = vmatpush1.bf16.msra.mxu0 0
        %776 = vmatprep.subr.bf16.mxu0 0
        %777 = vmatpush1.bf16.msra.mxu0 0
        %778 = vmatprep.subr.bf16.mxu0 0
        %779 = vmatpush1.bf16.msra.mxu0 0
        %780 = vmatprep.subr.bf16.mxu0 0
        %781 = vmatpush1.bf16.msra.mxu0 0
        %782 = vmatprep.mubr.bf16.mxu0 0
        %783 = vmatmul.mubr.bf16.gmra.mrb[0].mxu0 %v748
        %v784 = vpop.f32.mrb[0].mxu0
        %v785 = vadd.f32 0.0, %v784
        %v786 = vpop.f32.mrb[0].mxu0
        %v787 = vpop.f32.mrb[0].mxu0
        %v788 = vadd.f32 0.0, %v787
        %v789 = vpop.f32.mrb[0].mxu0
        %790 = vdwg.mxu0
        %v793 = vunpack.c.l.b16 %v735
        %v794 = vunpack.c.l.b16 %v736
        %v795 = vpack.c.b16 %v794, %v793
        %v798 = vsel %vm632, %v730, 0
        %800 = vmatprep.subr.bf16.mxu0 0
        %801 = vmatpush1.bf16.msra.mxu0 %v795
        %802 = vmatprep.subr.bf16.mxu0 0
        %803 = vmatpush1.bf16.msra.mxu0 0
        %804 = vmatprep.subr.bf16.mxu0 0
        %805 = vmatpush1.bf16.msra.mxu0 0
        %806 = vmatprep.subr.bf16.mxu0 0
        %807 = vmatpush1.bf16.msra.mxu0 0
        %808 = vmatprep.subr.bf16.mxu0 0
        %809 = vmatpush1.bf16.msra.mxu0 0
        %810 = vmatprep.subr.bf16.mxu0 0
        %811 = vmatpush1.bf16.msra.mxu0 0
        %812 = vmatprep.subr.bf16.mxu0 0
        %813 = vmatpush1.bf16.msra.mxu0 0
        %814 = vmatprep.subr.bf16.mxu0 0
        %815 = vmatpush1.bf16.msra.mxu0 0
        %816 = vmatprep.subr.bf16.mxu0 0
        %817 = vmatpush1.bf16.msra.mxu0 0
        %818 = vmatprep.subr.bf16.mxu0 0
        %819 = vmatpush1.bf16.msra.mxu0 0
        %820 = vmatprep.subr.bf16.mxu0 0
        %821 = vmatpush1.bf16.msra.mxu0 0
        %822 = vmatprep.subr.bf16.mxu0 0
        %823 = vmatpush1.bf16.msra.mxu0 0
        %824 = vmatprep.subr.bf16.mxu0 0
        %825 = vmatpush1.bf16.msra.mxu0 0
        %826 = vmatprep.subr.bf16.mxu0 0
        %827 = vmatpush1.bf16.msra.mxu0 0
        %828 = vmatprep.subr.bf16.mxu0 0
        %829 = vmatpush1.bf16.msra.mxu0 0
        %830 = vmatprep.subr.bf16.mxu0 0
        %831 = vmatpush1.bf16.msra.mxu0 0
        %832 = vmatprep.mubr.bf16.mxu0 0
        %833 = vmatmul.mubr.bf16.gmra.mrb[0].mxu0 %v798
        %v834 = vpop.f32.mrb[0].mxu0
        %v835 = vadd.f32 0.0, %v834
        %v836 = vpop.f32.mrb[0].mxu0
        %v837 = vpop.f32.mrb[0].mxu0
        %v838 = vadd.f32 0.0, %v837
        %v839 = vpop.f32.mrb[0].mxu0
        %840 = vdwg.mxu0
        %v843 = vunpack.c.l.b16 %v737
        %v844 = vunpack.c.l.b16 %v738
        %v845 = vpack.c.b16 %v844, %v843
        %v848 = vsel %vm632, %v731, 0
        %850 = vmatprep.subr.bf16.mxu0 0
        %851 = vmatpush1.bf16.msra.mxu0 %v845
        %852 = vmatprep.subr.bf16.mxu0 0
        %853 = vmatpush1.bf16.msra.mxu0 0
        %854 = vmatprep.subr.bf16.mxu0 0
        %855 = vmatpush1.bf16.msra.mxu0 0
        %856 = vmatprep.subr.bf16.mxu0 0
        %857 = vmatpush1.bf16.msra.mxu0 0
        %858 = vmatprep.subr.bf16.mxu0 0
        %859 = vmatpush1.bf16.msra.mxu0 0
        %860 = vmatprep.subr.bf16.mxu0 0
        %861 = vmatpush1.bf16.msra.mxu0 0
        %862 = vmatprep.subr.bf16.mxu0 0
        %863 = vmatpush1.bf16.msra.mxu0 0
        %864 = vmatprep.subr.bf16.mxu0 0
        %865 = vmatpush1.bf16.msra.mxu0 0
        %866 = vmatprep.subr.bf16.mxu0 0
        %867 = vmatpush1.bf16.msra.mxu0 0
        %868 = vmatprep.subr.bf16.mxu0 0
        %869 = vmatpush1.bf16.msra.mxu0 0
        %870 = vmatprep.subr.bf16.mxu0 0
        %871 = vmatpush1.bf16.msra.mxu0 0
        %872 = vmatprep.subr.bf16.mxu0 0
        %873 = vmatpush1.bf16.msra.mxu0 0
        %874 = vmatprep.subr.bf16.mxu0 0
        %875 = vmatpush1.bf16.msra.mxu0 0
        %876 = vmatprep.subr.bf16.mxu0 0
        %877 = vmatpush1.bf16.msra.mxu0 0
        %878 = vmatprep.subr.bf16.mxu0 0
        %879 = vmatpush1.bf16.msra.mxu0 0
        %880 = vmatprep.subr.bf16.mxu0 0
        %881 = vmatpush1.bf16.msra.mxu0 0
        %882 = vmatprep.mubr.bf16.mxu0 0
        %883 = vmatmul.mubr.bf16.gmra.mrb[0].mxu0 %v848
        %v884 = vpop.f32.mrb[0].mxu0
        %v885 = vadd.f32 0.0, %v884
        %v886 = vpop.f32.mrb[0].mxu0
        %v887 = vpop.f32.mrb[0].mxu0
        %v888 = vadd.f32 0.0, %v887
        %v889 = vpop.f32.mrb[0].mxu0
        %890 = vdwg.mxu0
        %v893 = vunpack.c.l.b16 %v739
        %v894 = vunpack.c.l.b16 %v740
        %v895 = vpack.c.b16 %v894, %v893
        %v898 = vsel %vm632, %v732, 0
        %900 = vmatprep.subr.bf16.mxu0 0
        %901 = vmatpush1.bf16.msra.mxu0 %v895
        %902 = vmatprep.subr.bf16.mxu0 0
        %903 = vmatpush1.bf16.msra.mxu0 0
        %904 = vmatprep.subr.bf16.mxu0 0
        %905 = vmatpush1.bf16.msra.mxu0 0
        %906 = vmatprep.subr.bf16.mxu0 0
        %907 = vmatpush1.bf16.msra.mxu0 0
        %908 = vmatprep.subr.bf16.mxu0 0
        %909 = vmatpush1.bf16.msra.mxu0 0
        %910 = vmatprep.subr.bf16.mxu0 0
        %911 = vmatpush1.bf16.msra.mxu0 0
        %912 = vmatprep.subr.bf16.mxu0 0
        %913 = vmatpush1.bf16.msra.mxu0 0
        %914 = vmatprep.subr.bf16.mxu0 0
        %915 = vmatpush1.bf16.msra.mxu0 0
        %916 = vmatprep.subr.bf16.mxu0 0
        %917 = vmatpush1.bf16.msra.mxu0 0
        %918 = vmatprep.subr.bf16.mxu0 0
        %919 = vmatpush1.bf16.msra.mxu0 0
        %920 = vmatprep.subr.bf16.mxu0 0
        %921 = vmatpush1.bf16.msra.mxu0 0
        %922 = vmatprep.subr.bf16.mxu0 0
        %923 = vmatpush1.bf16.msra.mxu0 0
        %924 = vmatprep.subr.bf16.mxu0 0
        %925 = vmatpush1.bf16.msra.mxu0 0
        %926 = vmatprep.subr.bf16.mxu0 0
        %927 = vmatpush1.bf16.msra.mxu0 0
        %928 = vmatprep.subr.bf16.mxu0 0
        %929 = vmatpush1.bf16.msra.mxu0 0
        %930 = vmatprep.subr.bf16.mxu0 0
        %931 = vmatpush1.bf16.msra.mxu0 0
        %932 = vmatprep.mubr.bf16.mxu0 0
        %933 = vmatmul.mubr.bf16.gmra.mrb[0].mxu0 %v898
        %v934 = vpop.f32.mrb[0].mxu0
        %v935 = vadd.f32 0.0, %v934
        %v936 = vpop.f32.mrb[0].mxu0
        %v937 = vpop.f32.mrb[0].mxu0
        %v938 = vadd.f32 0.0, %v937
        %v939 = vpop.f32.mrb[0].mxu0
        %940 = vdwg.mxu0
        %941 = vst.msk [vmem:[%s319] sm:$0xff] %vm428, %v785
        %942 = vst.msk [vmem:[%s319 + $0x8] sm:$0xff] %vm428, %v788
        %943 = vst.msk [vmem:[%s319 + $0x10] sm:$0xff] %vm428, %v835
        %944 = vst.msk [vmem:[%s319 + $0x18] sm:$0xff] %vm428, %v838
        %945 = vst.msk [vmem:[%s319 + $0x20] sm:$0xff] %vm428, %v885
        %946 = vst.msk [vmem:[%s319 + $0x28] sm:$0xff] %vm428, %v888
        %947 = vst.msk [vmem:[%s319 + $0x30] sm:$0xff] %vm428, %v935
        %948 = vst.msk [vmem:[%s319 + $0x38] sm:$0xff] %vm428, %v938
        %v953 = vunpack.c.l.b16 %v729
        %v954 = vunpack.c.h.b16 %v729
        %v955 = vunpack.c.l.b16 %v730
        %v956 = vunpack.c.h.b16 %v730
        %v957 = vunpack.c.l.b16 %v731
        %v958 = vunpack.c.h.b16 %v731
        %v959 = vunpack.c.l.b16 %v732
        %v960 = vunpack.c.h.b16 %v732
        %v961 = vpack.c.b16 %v953, %v953
        %v962 = vpack.c.b16 %v954, %v954
        %v963 = vpack.c.b16 %v955, %v955
        %v964 = vpack.c.b16 %v956, %v956
        %v965 = vpack.c.b16 %v957, %v957
        %v966 = vpack.c.b16 %v958, %v958
        %v967 = vpack.c.b16 %v959, %v959
        %v968 = vpack.c.b16 %v960, %v960
        %vm977 = vcmask 125952
        %978 = vst.msk [vmem:[%s326] sm:$0xf] %vm977, %v961
        %979 = vst.msk [vmem:[%s326 + $0x4] sm:$0xf] %vm977, %v962
        %980 = vst.msk [vmem:[%s326 + $0x8] sm:$0xf] %vm977, %v963
        %981 = vst.msk [vmem:[%s326 + $0xc] sm:$0xf] %vm977, %v964
        %982 = vst.msk [vmem:[%s326 + $0x10] sm:$0xf] %vm977, %v965
        %983 = vst.msk [vmem:[%s326 + $0x14] sm:$0xf] %vm977, %v966
        %984 = vst.msk [vmem:[%s326 + $0x18] sm:$0xf] %vm977, %v967
        %985 = vst.msk [vmem:[%s326 + $0x1c] sm:$0xf] %vm977, %v968
        %s986 = sand.u32 %s130, 1
        %s987 = scalar_lea.sflag [#allocation5], %s986
        %s988 = sand.u32 %s130, 1
        %s989 = smul.addr %s988, 64
        %s990 = scalar_lea.vmem [#allocation9], %s989
        %s991 = sand.u32 %s158, 1
        %s992 = scalar_lea.sflag [#allocation11], %s991
        %s993 = sand.u32 %s158, 1
        %s994 = smul.addr %s993, 32
        %s995 = scalar_lea.vmem [#allocation10], %s994
        // Predicated region
        $region49: #{tpu_custom_call.1} parent=31 // pred_check
          %p996 = pneg %p140
        $region50: #{tpu_custom_call.1} parent=31 // pred_check_branch
          %998 = sbr.rel (%p996) target = $region52
        $region51: #{tpu_custom_call.1} parent=31 // pred_region
          %s999 = smul.u32 4, %s32
          %s1000 = smul.u32 2, %s33
          %s1002 = ssub.s32 1024, 1024
          %1003 = vsyncadd %s987, %s1002
          %s1004 = smul.addr %s999, 2
          %s1005 = sadd.s32 %s1000, %s1004
          %s1006 = smul.addr %s1005, 128
          %s1007 = scalar_lea.hbm %s3, %s1006
          %s1008 = sshll.u32 %s990, 4
          %s1009 = int_to_ptr.vmem [resolvable:$true] %s1008
          %1014 = dma.vmem_to_hbm [thread:$0]  %s1009, 1024, %s1007, %s987, 128, 128, 8
        $region52: #{tpu_custom_call.1} parent=31 // pred_fallthru
          _
        // Predicated region
        $region53: #{tpu_custom_call.1} parent=31 // pred_check
          %p1015 = pneg %p168
        $region54: #{tpu_custom_call.1} parent=31 // pred_check_branch
          %1017 = sbr.rel (%p1015) target = $region56
        $region55: #{tpu_custom_call.1} parent=31 // pred_region
          %s1018 = smul.u32 4, %s32
          %s1019 = smul.u32 2, %s33
          %s1021 = ssub.s32 512, 512
          %1022 = vsyncadd %s992, %s1021
          %s1023 = smul.addr %s1018, 2
          %s1024 = sadd.s32 %s1019, %s1023
          %s1025 = smul.addr %s1024, 64
          %s1026 = scalar_lea.hbm %s4, %s1025
          %s1027 = sshll.u32 %s995, 4
          %s1028 = int_to_ptr.vmem [resolvable:$true] %s1027
          %1033 = dma.vmem_to_hbm [thread:$0]  %s1028, 512, %s1026, %s992, 64, 64, 4
        $region56: #{tpu_custom_call.1} parent=31 // pred_fallthru
          _
      $region32: #{tpu_custom_call.1} parent=5 // pred_fallthru
        _
      %p1034 = scmp.le.s32.totalorder 2, %s23
      // Predicated region
      $region57: #{tpu_custom_call.1} parent=5 // pred_check
        %p1035 = pneg %p1034
      $region58: #{tpu_custom_call.1} parent=5 // pred_check_branch
        %1037 = sbr.rel (%p1035) target = $region60
      $region59: #{tpu_custom_call.1} parent=5 // pred_region
        %s1038 = ssub.s32 %s23, 2
        // Predicated region
        $region61: #{tpu_custom_call.1} parent=59 // pred_check
          %p1039 = pneg %p146
        $region62: #{tpu_custom_call.1} parent=59 // pred_check_branch
          %1041 = sbr.rel (%p1039) target = $region64
        $region63: #{tpu_custom_call.1} parent=59 // pred_region
          %s1042 = sand.u32 %s131, 1
          %s1043 = scalar_lea.sflag [#allocation5], %s1042
          %s1044 = sand.u32 %s131, 1
          %s1045 = smul.addr %s1044, 64
          %s1046 = scalar_lea.vmem [#allocation9], %s1045
          %1047 = dma.done %s1043, 1024
        $region64: #{tpu_custom_call.1} parent=59 // pred_fallthru
          _
        // Predicated region
        $region65: #{tpu_custom_call.1} parent=59 // pred_check
          %p1048 = pneg %p174
        $region66: #{tpu_custom_call.1} parent=59 // pred_check_branch
          %1050 = sbr.rel (%p1048) target = $region68
        $region67: #{tpu_custom_call.1} parent=59 // pred_region
          %s1051 = sand.u32 %s159, 1
          %s1052 = scalar_lea.sflag [#allocation11], %s1051
          %s1053 = sand.u32 %s159, 1
          %s1054 = smul.addr %s1053, 32
          %s1055 = scalar_lea.vmem [#allocation10], %s1054
          %1056 = dma.done %s1052, 512
        $region68: #{tpu_custom_call.1} parent=59 // pred_fallthru
          _
      $region60: #{tpu_custom_call.1} parent=5 // pred_fallthru
        _
    $region6: #{tpu_custom_call.1} parent=1 // loop_footer
      %s27 = sadd.s32 1, %s23
    $region7: #{tpu_custom_call.1} parent=1 // loop_footer_branch
      %22 = sbr.rel target = $region3
    $region8: #{tpu_custom_call.1} parent=1 // loop_exit
      _
    %1057 = vsyncpa [#allocation4], 1
    %s1058 = scalar_lea.sflag [#allocation4], 1
    %1059 = vsyncpa %s1058, 1
    %1060 = vsyncpa [#allocation7], 1
    %s1061 = scalar_lea.sflag [#allocation7], 1
    %1062 = vsyncpa %s1061, 1
    %1063 = vsyncpa [#allocation5], 1
    %s1064 = scalar_lea.sflag [#allocation5], 1
    %1065 = vsyncpa %s1064, 1
    %1066 = vsyncpa [#allocation11], 1
    %s1067 = scalar_lea.sflag [#allocation11], 1
    %1068 = vsyncpa %s1067, 1

</llo_original>
